<compile_context>
chip_gen: v7x
topology: tpu7x:2x2x1
jax: 0.10.0
libtpu: 0.0.40
codegen_flags: <defaults>
</compile_context>

<pallas_src>
import jax
import jax.numpy as jnp
import numpy as np
from jax.experimental import pallas as pl
from jax.experimental.pallas import tpu as pltpu


def curves_kernel(params_ref, w_ref, noise_ref, pts_ref, pts_m_ref):
    # params_ref: (n_curves, n_ctl*3)            control points, (k, xyz) flattened
    # w_ref:      (n_ctl*3, num_t*3)             kron(matrix1.T, I3); matrix1 = T @ W
    # noise_ref:  (multiply, n_curves, num_t*3)  pre-scaled Gaussian noise
    # pts_ref:    (n_curves, num_t*3)            lane-dense curve points (row n, col i*3+j)
    # pts_m_ref:  (multiply, n_curves, num_t*3)  repeated + noisy points
    pts = jnp.dot(params_ref[...], w_ref[...],
                  preferred_element_type=jnp.float32)       # (n_curves, num_t*3)
    pts_ref[...] = pts.astype(pts_ref.dtype)
    # repeat along the "multiply" axis (broadcast) + pre-scaled Gaussian noise
    pts_m_ref[...] = (pts[None, :, :] + noise_ref[...]).astype(pts_m_ref.dtype)


@jax.jit
def curves_forward(matrix_t, matrix_w, params, noise):
    """Pallas forward. `noise` must already be scaled by sqrt(variance).

    matrix_t: (num_t, n_ctl)   rows [t^3, t^2, t, 1]
    matrix_w: (n_ctl, n_ctl)   Bezier basis matrix
    params:   (n_curves, n_ctl, 3)
    noise:    (multiply, n_curves, num_t, 3)
    """
    num_t, n_ctl = matrix_t.shape
    n_curves = params.shape[0]
    multiply = noise.shape[0]

    # --- curve-independent basis work, hoisted out of the kernel ---------
    matrix1 = jnp.dot(matrix_t, matrix_w)                            # (num_t, n_ctl)
    # W[k*3 + j', i*3 + j] = matrix1[i, k] * delta(j', j)  so that
    # params_flat @ W == matrix2 laid out lane-dense as (n_curves, num_t*3).
    w_kron = jnp.kron(matrix1.T, jnp.eye(3, dtype=matrix1.dtype))    # (n_ctl*3, num_t*3)

    params_flat = params.reshape(n_curves, n_ctl * 3)                # pure view
    noise_flat = noise.reshape(multiply, n_curves, num_t * 3)        # pure view

    out_shapes = (
        jax.ShapeDtypeStruct((n_curves, num_t * 3), jnp.float32),
        jax.ShapeDtypeStruct((multiply, n_curves, num_t * 3), jnp.float32),
    )

    grid_spec = pltpu.PrefetchScalarGridSpec(
        num_scalar_prefetch=0,
        grid=(1,),                                                   # single invocation
        in_specs=[
            pl.BlockSpec((n_curves, n_ctl * 3), lambda i: (0, 0)),
            pl.BlockSpec((n_ctl * 3, num_t * 3), lambda i: (0, 0)),
            pl.BlockSpec((multiply, n_curves, num_t * 3), lambda i: (0, 0, 0)),
        ],
        out_specs=[
            pl.BlockSpec((n_curves, num_t * 3), lambda i: (0, 0)),
            pl.BlockSpec((multiply, n_curves, num_t * 3), lambda i: (0, 0, 0)),
        ],
    )

    pts_flat, pts_m_flat = pl.pallas_call(
        curves_kernel,
        out_shape=out_shapes,
        grid_spec=grid_spec,
        compiler_params=pltpu.CompilerParams(dimension_semantics=("arbitrary",)),
    )(params_flat, w_kron, noise_flat)

    # Pure-view reshapes back to the torch output layout (no extra copy pass):
    #   (n_curves, num_t*3)            -> (1, n_curves*num_t, 3)
    #   (multiply, n_curves, num_t*3)  -> (1, multiply*n_curves*num_t, 3)
    pts_curve = pts_flat.reshape(1, n_curves * num_t, 3)
    pts_curve_m = pts_m_flat.reshape(1, multiply * n_curves * num_t, 3)
    return pts_curve, pts_curve_m, params


def build_inputs(n_curves=12, num=100, multiply=5, variance=0.5, curve_type="cubic"):
    assert curve_type == "cubic"
    # Cubic Bezier basis matrix (matrix_w)
    matrix_w = jnp.array(
        [[-1.0, 3.0, -3.0, 1.0],
         [3.0, -6.0, 3.0, 0.0],
         [-3.0, 3.0, 0.0, 0.0],
         [1.0, 0.0, 0.0, 0.0]],
        dtype=jnp.float32,
    )
    # matrix_t: rows [t^3, t^2, t, 1] for t in linspace(0, 1, num)
    t = np.linspace(0.0, 1.0, num)
    matrix_t = jnp.asarray(np.stack([t**3, t**2, t, np.ones_like(t)], axis=1),
                           dtype=jnp.float32)

    key = jax.random.PRNGKey(0)
    k_params, k_noise = jax.random.split(key)
    # torch.rand(n_curves, 4, 3): uniform [0, 1)
    params = jax.random.uniform(k_params, (n_curves, 4, 3), dtype=jnp.float32)
    # randn_like(pts_curve_m) * sqrt(variance); laid out as (multiply, n_curves, num, 3)
    noise = (variance ** 0.5) * jax.random.normal(
        k_noise, (multiply, n_curves, num, 3), dtype=jnp.float32
    )
    return matrix_t, matrix_w, params, noise


if __name__ == "__main__":
    n_curves, num, multiply, variance = 12, 100, 5, 0.5
    matrix_t, matrix_w, params, noise = build_inputs(n_curves, num, multiply, variance)

    pts_curve, pts_curve_m, params_out = curves_forward(matrix_t, matrix_w, params, noise)
    jax.block_until_ready((pts_curve, pts_curve_m, params_out))

    # Pure-JAX reference check
    m1_ref = jnp.einsum("ik,kj->ij", matrix_t, matrix_w)
    m2_ref = jnp.einsum("ik,nkj->nij", m1_ref, params)
    pts_ref = m2_ref.reshape(1, -1, 3)
    pts_m_ref = jnp.tile(pts_ref, (1, multiply, 1)) + noise.reshape(1, -1, 3)

    assert pts_curve.shape == (1, n_curves * num, 3)
    assert pts_curve_m.shape == (1, n_curves * num * multiply, 3)
    np.testing.assert_allclose(np.asarray(pts_curve), np.asarray(pts_ref),
                               rtol=1e-4, atol=1e-4)
    np.testing.assert_allclose(np.asarray(pts_curve_m), np.asarray(pts_m_ref),
                               rtol=1e-4, atol=1e-4)
    np.testing.assert_allclose(np.asarray(params_out), np.asarray(params))

    print("KERNEL_OK")
</pallas_src>

<mosaic_0001>
module attributes {stable_mosaic.version = 11 : i64} {
  func.func @curves_kernel(%arg0: i32, %arg1: memref<12x12xf32, #tpu.memory_space<vmem>>, %arg2: memref<12x300xf32, #tpu.memory_space<vmem>>, %arg3: memref<5x12x300xf32, #tpu.memory_space<vmem>>, %arg4: memref<12x300xf32, #tpu.memory_space<vmem>>, %arg5: memref<5x12x300xf32, #tpu.memory_space<vmem>>) attributes {dimension_semantics = [#tpu.dimension_semantics<arbitrary>], iteration_bounds = array<i64: 1>, scalar_prefetch = 0 : i64, scratch_operands = 0 : i64, tpu.core_type = #tpu.core_type<tc>, window_params = [{pipeline_mode = #tpu.pipeline_mode<synchronous>, transform_indices = @transform_0, window_bounds = array<i64: 12, 12>}, {pipeline_mode = #tpu.pipeline_mode<synchronous>, transform_indices = @transform_1, window_bounds = array<i64: 12, 300>}, {pipeline_mode = #tpu.pipeline_mode<synchronous>, transform_indices = @transform_2, window_bounds = array<i64: 5, 12, 300>}, {pipeline_mode = #tpu.pipeline_mode<synchronous>, transform_indices = @transform_3, window_bounds = array<i64: 12, 300>}, {pipeline_mode = #tpu.pipeline_mode<synchronous>, transform_indices = @transform_4, window_bounds = array<i64: 5, 12, 300>}]} {
    %c0 = arith.constant 0 : index
    %c0_0 = arith.constant 0 : index
    %0 = vector.load %arg1[%c0, %c0_0] : memref<12x12xf32, #tpu.memory_space<vmem>>, vector<12x12xf32>
    %c0_1 = arith.constant 0 : index
    %c0_2 = arith.constant 0 : index
    %1 = vector.load %arg2[%c0_1, %c0_2] : memref<12x300xf32, #tpu.memory_space<vmem>>, vector<12x300xf32>
    %cst = arith.constant dense<0.000000e+00> : vector<12x300xf32>
    %2 = tpu.matmul %0, %1, %cst {dimension_numbers = #tpu.dot_dimension_numbers<[1], [0], [0], [1], [0, 0, 1, 1], [], []>} : vector<12x12xf32>, vector<12x300xf32>, vector<12x300xf32> -> vector<12x300xf32>
    %c0_3 = arith.constant 0 : index
    %c0_4 = arith.constant 0 : index
    %3 = vector.load %arg4[%c0_3, %c0_4] : memref<12x300xf32, #tpu.memory_space<vmem>>, vector<12x300xf32>
    tpu.vector_store %arg4[%c0_3, %c0_4], %2 {strides = array<i32>} : memref<12x300xf32, #tpu.memory_space<vmem>>, vector<12x300xf32>,
    %4 = vector.shape_cast %2 : vector<12x300xf32> to vector<1x12x300xf32>
    %c0_5 = arith.constant 0 : index
    %c0_6 = arith.constant 0 : index
    %c0_7 = arith.constant 0 : index
    %5 = vector.load %arg3[%c0_5, %c0_6, %c0_7] : memref<5x12x300xf32, #tpu.memory_space<vmem>>, vector<5x12x300xf32>
    %6 = vector.broadcast %4 : vector<1x12x300xf32> to vector<5x12x300xf32>
    %7 = arith.addf %6, %5 : vector<5x12x300xf32>
    %c0_8 = arith.constant 0 : index
    %c0_9 = arith.constant 0 : index
    %c0_10 = arith.constant 0 : index
    %8 = vector.load %arg5[%c0_8, %c0_9, %c0_10] : memref<5x12x300xf32, #tpu.memory_space<vmem>>, vector<5x12x300xf32>
    tpu.vector_store %arg5[%c0_8, %c0_9, %c0_10], %7 {strides = array<i32>} : memref<5x12x300xf32, #tpu.memory_space<vmem>>, vector<5x12x300xf32>,
    return
  }
  func.func @transform_0(%arg0: i32) -> (i32, i32) {
    %c0_i32 = arith.constant 0 : i32
    %c0_i32_0 = arith.constant 0 : i32
    %c0_i32_1 = arith.constant 0 : i32
    return %c0_i32, %c0_i32_0 : i32, i32
  }
  func.func @transform_1(%arg0: i32) -> (i32, i32) {
    %c0_i32 = arith.constant 0 : i32
    %c0_i32_0 = arith.constant 0 : i32
    %c0_i32_1 = arith.constant 0 : i32
    return %c0_i32, %c0_i32_0 : i32, i32
  }
  func.func @transform_2(%arg0: i32) -> (i32, i32, i32) {
    %c0_i32 = arith.constant 0 : i32
    %c0_i32_0 = arith.constant 0 : i32
    %c0_i32_1 = arith.constant 0 : i32
    %c0_i32_2 = arith.constant 0 : i32
    return %c0_i32, %c0_i32_0, %c0_i32_1 : i32, i32, i32
  }
  func.func @transform_3(%arg0: i32) -> (i32, i32) {
    %c0_i32 = arith.constant 0 : i32
    %c0_i32_0 = arith.constant 0 : i32
    %c0_i32_1 = arith.constant 0 : i32
    return %c0_i32, %c0_i32_0 : i32, i32
  }
  func.func @transform_4(%arg0: i32) -> (i32, i32, i32) {
    %c0_i32 = arith.constant 0 : i32
    %c0_i32_0 = arith.constant 0 : i32
    %c0_i32_1 = arith.constant 0 : i32
    %c0_i32_2 = arith.constant 0 : i32
    return %c0_i32, %c0_i32_0, %c0_i32_1 : i32, i32, i32
  }
}

</mosaic_0001>

<llo_original>
// kernel: curves_forward.1
$region0: #{curves_forward.1}
  #allocation0 [shape = 'u32[]', space=smem, size = 0x4, offset = 0x4, fixed_abs, tag = 'smem constant byte address 0x4 - core index']
  #allocation1 [shape = 'u32[144,128]{1,0:T(1,128)}', space=vmem, size = 0x12000, scoped, tag = 'internal scratch']
  %s0 = inlined_call_operand.vmem [shape: f32[12,12], index: 0, kind: input, shape index: {}]
  %s1 = inlined_call_operand.vmem [shape: f32[12,300], index: 1, kind: input, shape index: {}]
  %s2 = inlined_call_operand.vmem [shape: f32[5,12,300], index: 2, kind: input, shape index: {}]
  %s3 = inlined_call_operand.vmem [shape: f32[12,300], index: 3, kind: output, shape index: {0}]
  %s4 = inlined_call_operand.vmem [shape: f32[5,12,300], index: 4, kind: output, shape index: {1}]
  %5 = xla_tuple %s3, %s4
  %s6 = sld [smem:[#allocation0]]
  $region30: #{curves_forward.1} parent=0
    _
  %s8 = ssub.s32 1, %s6
  %s9 = scalar_select 0, %s8, %s6
  // Predicated region
  $region2: #{curves_forward.1} parent=0 // pred_check
    _
  $region3: #{curves_forward.1} parent=0 // pred_check_branch
    %11 = sbr.rel (0) target = $region5
  $region4: #{curves_forward.1} parent=0 // pred_region
    _
  $region5: #{curves_forward.1} parent=0 // pred_fallthru
    _
  // Predicated region
  $region6: #{curves_forward.1} parent=0 // pred_check
    _
  $region7: #{curves_forward.1} parent=0 // pred_check_branch
    %13 = sbr.rel (0) target = $region9
  $region8: #{curves_forward.1} parent=0 // pred_region
    _
  $region9: #{curves_forward.1} parent=0 // pred_fallthru
    _
  // Predicated region
  $region10: #{curves_forward.1} parent=0 // pred_check
    _
  $region11: #{curves_forward.1} parent=0 // pred_check_branch
    %15 = sbr.rel (0) target = $region13
  $region12: #{curves_forward.1} parent=0 // pred_region
    _
  $region13: #{curves_forward.1} parent=0 // pred_fallthru
    _
  %v16 = vld [vmem:[%s0] sm:$0xff]
  %v17 = vld [vmem:[%s0 + $0x8] sm:$0xf]
  %v18 = vld [vmem:[%s1] sm:$0xff]
  %v19 = vld [vmem:[%s1 + $0x8] sm:$0xff]
  %v20 = vld [vmem:[%s1 + $0x10] sm:$0xff]
  %v21 = vld [vmem:[%s1 + $0x18] sm:$0xf]
  %v22 = vld [vmem:[%s1 + $0x20] sm:$0xf]
  %v23 = vld [vmem:[%s1 + $0x28] sm:$0xf]
  %vm24 = vcmask 97280
  %v26 = vsel %vm24, %v16, 0
  %v29 = vsel %vm24, %v17, 0
  %vm31 = vcmask 1043456
  %v33 = vsel %vm31, %v21, 0
  %v36 = vsel %vm31, %v22, 0
  %v39 = vsel %vm31, %v23, 0
  %41 = vmatprep.subr.mxu0 %v19
  %42 = vmatpush1.msra.mxu0 %v18
  %43 = vmatprep.subr.mxu0 %v36
  %44 = vmatpush1.msra.mxu0 %v33
  %45 = vmatprep.subr.mxu0 0.0
  %46 = vmatpush1.msra.mxu0 0.0
  %47 = vmatprep.subr.mxu0 0.0
  %48 = vmatpush1.msra.mxu0 0.0
  %49 = vmatprep.subr.mxu0 0.0
  %50 = vmatpush1.msra.mxu0 0.0
  %51 = vmatprep.subr.mxu0 0.0
  %52 = vmatpush1.msra.mxu0 0.0
  %53 = vmatprep.subr.mxu0 0.0
  %54 = vmatpush1.msra.mxu0 0.0
  %55 = vmatprep.subr.mxu0 0.0
  %56 = vmatpush1.msra.mxu0 0.0
  %57 = vmatprep.subr.mxu0 0.0
  %58 = vmatpush1.msra.mxu0 0.0
  %59 = vmatprep.subr.mxu0 0.0
  %60 = vmatpush1.msra.mxu0 0.0
  %61 = vmatprep.subr.mxu0 0.0
  %62 = vmatpush1.msra.mxu0 0.0
  %63 = vmatprep.subr.mxu0 0.0
  %64 = vmatpush1.msra.mxu0 0.0
  %65 = vmatprep.subr.mxu0 0.0
  %66 = vmatpush1.msra.mxu0 0.0
  %67 = vmatprep.subr.mxu0 0.0
  %68 = vmatpush1.msra.mxu0 0.0
  %69 = vmatprep.subr.mxu0 0.0
  %70 = vmatpush1.msra.mxu0 0.0
  %71 = vmatprep.subr.mxu0 0.0
  %72 = vmatpush1.msra.mxu0 0.0
  %73 = vmatprep.subr.mxu0 0.0
  %74 = vmatpush1.msra.mxu0 0.0
  %75 = vmatprep.subr.mxu0 0.0
  %76 = vmatpush1.msra.mxu0 0.0
  %77 = vmatprep.subr.mxu0 0.0
  %78 = vmatpush1.msra.mxu0 0.0
  %79 = vmatprep.subr.mxu0 0.0
  %80 = vmatpush1.msra.mxu0 0.0
  %81 = vmatprep.subr.mxu0 0.0
  %82 = vmatpush1.msra.mxu0 0.0
  %83 = vmatprep.subr.mxu0 0.0
  %84 = vmatpush1.msra.mxu0 0.0
  %85 = vmatprep.subr.mxu0 0.0
  %86 = vmatpush1.msra.mxu0 0.0
  %87 = vmatprep.subr.mxu0 0.0
  %88 = vmatpush1.msra.mxu0 0.0
  %89 = vmatprep.subr.mxu0 0.0
  %90 = vmatpush1.msra.mxu0 0.0
  %91 = vmatprep.subr.mxu0 0.0
  %92 = vmatpush1.msra.mxu0 0.0
  %93 = vmatprep.subr.mxu0 0.0
  %94 = vmatpush1.msra.mxu0 0.0
  %95 = vmatprep.subr.mxu0 0.0
  %96 = vmatpush1.msra.mxu0 0.0
  %97 = vmatprep.subr.mxu0 0.0
  %98 = vmatpush1.msra.mxu0 0.0
  %99 = vmatprep.subr.mxu0 0.0
  %100 = vmatpush1.msra.mxu0 0.0
  %101 = vmatprep.subr.mxu0 0.0
  %102 = vmatpush1.msra.mxu0 0.0
  %103 = vmatprep.subr.mxu0 0.0
  %104 = vmatpush1.msra.mxu0 0.0
  %105 = vmatprep.mubr.f32.mxu0 0.0
  %106 = vmatmul.mubr.f32.gmra.mrb[0].mxu0 %v26
  %v107 = vpop.f32.mrb[0].mxu0
  %v108 = vadd.f32 0.0, %v107
  %v109 = vpop.f32.mrb[0].mxu0
  %v110 = vadd.f32 0.0, %v109
  %111 = vmatprep.mubr.f32.mxu0 0.0
  %112 = vmatmul.mubr.f32.gmra.mrb[0].mxu0 %v29
  %v113 = vpop.f32.mrb[0].mxu0
  %v114 = vadd.f32 0.0, %v113
  %v115 = vpop.f32.mrb[0].mxu0
  %v116 = vadd.f32 0.0, %v115
  %117 = vdwg.mxu0
  %118 = vmatprep.subr.mxu0 0.0
  %119 = vmatpush1.msra.mxu0 %v20
  %120 = vmatprep.subr.mxu0 0.0
  %121 = vmatpush1.msra.mxu0 %v39
  %122 = vmatprep.subr.mxu0 0.0
  %123 = vmatpush1.msra.mxu0 0.0
  %124 = vmatprep.subr.mxu0 0.0
  %125 = vmatpush1.msra.mxu0 0.0
  %126 = vmatprep.subr.mxu0 0.0
  %127 = vmatpush1.msra.mxu0 0.0
  %128 = vmatprep.subr.mxu0 0.0
  %129 = vmatpush1.msra.mxu0 0.0
  %130 = vmatprep.subr.mxu0 0.0
  %131 = vmatpush1.msra.mxu0 0.0
  %132 = vmatprep.subr.mxu0 0.0
  %133 = vmatpush1.msra.mxu0 0.0
  %134 = vmatprep.subr.mxu0 0.0
  %135 = vmatpush1.msra.mxu0 0.0
  %136 = vmatprep.subr.mxu0 0.0
  %137 = vmatpush1.msra.mxu0 0.0
  %138 = vmatprep.subr.mxu0 0.0
  %139 = vmatpush1.msra.mxu0 0.0
  %140 = vmatprep.subr.mxu0 0.0
  %141 = vmatpush1.msra.mxu0 0.0
  %142 = vmatprep.subr.mxu0 0.0
  %143 = vmatpush1.msra.mxu0 0.0
  %144 = vmatprep.subr.mxu0 0.0
  %145 = vmatpush1.msra.mxu0 0.0
  %146 = vmatprep.subr.mxu0 0.0
  %147 = vmatpush1.msra.mxu0 0.0
  %148 = vmatprep.subr.mxu0 0.0
  %149 = vmatpush1.msra.mxu0 0.0
  %150 = vmatprep.subr.mxu0 0.0
  %151 = vmatpush1.msra.mxu0 0.0
  %152 = vmatprep.subr.mxu0 0.0
  %153 = vmatpush1.msra.mxu0 0.0
  %154 = vmatprep.subr.mxu0 0.0
  %155 = vmatpush1.msra.mxu0 0.0
  %156 = vmatprep.subr.mxu0 0.0
  %157 = vmatpush1.msra.mxu0 0.0
  %158 = vmatprep.subr.mxu0 0.0
  %159 = vmatpush1.msra.mxu0 0.0
  %160 = vmatprep.subr.mxu0 0.0
  %161 = vmatpush1.msra.mxu0 0.0
  %162 = vmatprep.subr.mxu0 0.0
  %163 = vmatpush1.msra.mxu0 0.0
  %164 = vmatprep.subr.mxu0 0.0
  %165 = vmatpush1.msra.mxu0 0.0
  %166 = vmatprep.subr.mxu0 0.0
  %167 = vmatpush1.msra.mxu0 0.0
  %168 = vmatprep.subr.mxu0 0.0
  %169 = vmatpush1.msra.mxu0 0.0
  %170 = vmatprep.subr.mxu0 0.0
  %171 = vmatpush1.msra.mxu0 0.0
  %172 = vmatprep.subr.mxu0 0.0
  %173 = vmatpush1.msra.mxu0 0.0
  %174 = vmatprep.subr.mxu0 0.0
  %175 = vmatpush1.msra.mxu0 0.0
  %176 = vmatprep.subr.mxu0 0.0
  %177 = vmatpush1.msra.mxu0 0.0
  %178 = vmatprep.subr.mxu0 0.0
  %179 = vmatpush1.msra.mxu0 0.0
  %180 = vmatprep.subr.mxu0 0.0
  %181 = vmatpush1.msra.mxu0 0.0
  %182 = vmatprep.mubr.f32.mxu0 0.0
  %183 = vmatmul.mubr.f32.gmra.mrb[0].mxu0 %v26
  %v184 = vpop.f32.mrb[0].mxu0
  %v185 = vadd.f32 0.0, %v184
  %v186 = vpop.f32.mrb[0].mxu0
  %187 = vmatprep.mubr.f32.mxu0 0.0
  %188 = vmatmul.mubr.f32.gmra.mrb[0].mxu0 %v29
  %v189 = vpop.f32.mrb[0].mxu0
  %v190 = vadd.f32 0.0, %v189
  %v191 = vpop.f32.mrb[0].mxu0
  %192 = vdwg.mxu0
  %193 = vst [vmem:[%s3] sm:$0xff] %v108
  %194 = vst [vmem:[%s3 + $0x8] sm:$0xff] %v110
  %vm195 = vcmask 359424
  %196 = vst.msk [vmem:[%s3 + $0x10] sm:$0xff] %vm195, %v185
  %197 = vst [vmem:[%s3 + $0x18] sm:$0xf] %v114
  %198 = vst [vmem:[%s3 + $0x20] sm:$0xf] %v116
  %vm199 = vcmask 355328
  %200 = vst.msk [vmem:[%s3 + $0x28] sm:$0xf] %vm199, %v190
  %v201 = vld [vmem:[%s2] sm:$0xff]
  %v202 = vld [vmem:[%s2 + $0x8] sm:$0xff]
  %v203 = vld [vmem:[%s2 + $0x10] sm:$0xff]
  %v204 = vld [vmem:[%s2 + $0x18] sm:$0xf]
  %v205 = vld [vmem:[%s2 + $0x20] sm:$0xf]
  %v206 = vld [vmem:[%s2 + $0x28] sm:$0xf]
  %v207 = vld [vmem:[%s2 + $0x30] sm:$0xff]
  %v208 = vld [vmem:[%s2 + $0x38] sm:$0xff]
  %v209 = vld [vmem:[%s2 + $0x40] sm:$0xff]
  %v210 = vld [vmem:[%s2 + $0x48] sm:$0xf]
  %v211 = vld [vmem:[%s2 + $0x50] sm:$0xf]
  %v212 = vld [vmem:[%s2 + $0x58] sm:$0xf]
  %v213 = vld [vmem:[%s2 + $0x60] sm:$0xff]
  %v214 = vld [vmem:[%s2 + $0x68] sm:$0xff]
  %v215 = vld [vmem:[%s2 + $0x70] sm:$0xff]
  %v216 = vld [vmem:[%s2 + $0x78] sm:$0xf]
  %v217 = vld [vmem:[%s2 + $0x80] sm:$0xf]
  %v218 = vld [vmem:[%s2 + $0x88] sm:$0xf]
  %v219 = vld [vmem:[%s2 + $0x90] sm:$0xff]
  %v220 = vld [vmem:[%s2 + $0x98] sm:$0xff]
  %v221 = vld [vmem:[%s2 + $0xa0] sm:$0xff]
  %v222 = vld [vmem:[%s2 + $0xa8] sm:$0xf]
  %v223 = vld [vmem:[%s2 + $0xb0] sm:$0xf]
  %v224 = vld [vmem:[%s2 + $0xb8] sm:$0xf]
  %v225 = vld [vmem:[%s2 + $0xc0] sm:$0xff]
  %v226 = vld [vmem:[%s2 + $0xc8] sm:$0xff]
  %v227 = vld [vmem:[%s2 + $0xd0] sm:$0xff]
  %v228 = vld [vmem:[%s2 + $0xd8] sm:$0xf]
  %v229 = vld [vmem:[%s2 + $0xe0] sm:$0xf]
  %v230 = vld [vmem:[%s2 + $0xe8] sm:$0xf]
  %v231 = vadd.f32 %v108, %v201
  %v232 = vadd.f32 %v110, %v202
  %v233 = vadd.f32 %v185, %v203
  %v234 = vadd.f32 %v114, %v204
  %v235 = vadd.f32 %v116, %v205
  %v236 = vadd.f32 %v190, %v206
  %v237 = vadd.f32 %v108, %v207
  %v238 = vadd.f32 %v110, %v208
  %v239 = vadd.f32 %v185, %v209
  %v240 = vadd.f32 %v114, %v210
  %v241 = vadd.f32 %v116, %v211
  %v242 = vadd.f32 %v190, %v212
  %v243 = vadd.f32 %v108, %v213
  %v244 = vadd.f32 %v110, %v214
  %v245 = vadd.f32 %v185, %v215
  %v246 = vadd.f32 %v114, %v216
  %v247 = vadd.f32 %v116, %v217
  %v248 = vadd.f32 %v190, %v218
  %v249 = vadd.f32 %v108, %v219
  %v250 = vadd.f32 %v110, %v220
  %v251 = vadd.f32 %v185, %v221
  %v252 = vadd.f32 %v114, %v222
  %v253 = vadd.f32 %v116, %v223
  %v254 = vadd.f32 %v190, %v224
  %v255 = vadd.f32 %v108, %v225
  %v256 = vadd.f32 %v110, %v226
  %v257 = vadd.f32 %v185, %v227
  %v258 = vadd.f32 %v114, %v228
  %v259 = vadd.f32 %v116, %v229
  %v260 = vadd.f32 %v190, %v230
  %261 = vst [vmem:[%s4] sm:$0xff] %v231
  %262 = vst [vmem:[%s4 + $0x8] sm:$0xff] %v232
  %263 = vst.msk [vmem:[%s4 + $0x10] sm:$0xff] %vm195, %v233
  %264 = vst [vmem:[%s4 + $0x18] sm:$0xf] %v234
  %265 = vst [vmem:[%s4 + $0x20] sm:$0xf] %v235
  %266 = vst.msk [vmem:[%s4 + $0x28] sm:$0xf] %vm199, %v236
  %267 = vst [vmem:[%s4 + $0x30] sm:$0xff] %v237
  %268 = vst [vmem:[%s4 + $0x38] sm:$0xff] %v238
  %269 = vst.msk [vmem:[%s4 + $0x40] sm:$0xff] %vm195, %v239
  %270 = vst [vmem:[%s4 + $0x48] sm:$0xf] %v240
  %271 = vst [vmem:[%s4 + $0x50] sm:$0xf] %v241
  %272 = vst.msk [vmem:[%s4 + $0x58] sm:$0xf] %vm199, %v242
  %273 = vst [vmem:[%s4 + $0x60] sm:$0xff] %v243
  %274 = vst [vmem:[%s4 + $0x68] sm:$0xff] %v244
  %275 = vst.msk [vmem:[%s4 + $0x70] sm:$0xff] %vm195, %v245
  %276 = vst [vmem:[%s4 + $0x78] sm:$0xf] %v246
  %277 = vst [vmem:[%s4 + $0x80] sm:$0xf] %v247
  %278 = vst.msk [vmem:[%s4 + $0x88] sm:$0xf] %vm199, %v248
  %279 = vst [vmem:[%s4 + $0x90] sm:$0xff] %v249
  %280 = vst [vmem:[%s4 + $0x98] sm:$0xff] %v250
  %281 = vst.msk [vmem:[%s4 + $0xa0] sm:$0xff] %vm195, %v251
  %282 = vst [vmem:[%s4 + $0xa8] sm:$0xf] %v252
  %283 = vst [vmem:[%s4 + $0xb0] sm:$0xf] %v253
  %284 = vst.msk [vmem:[%s4 + $0xb8] sm:$0xf] %vm199, %v254
  %285 = vst [vmem:[%s4 + $0xc0] sm:$0xff] %v255
  %286 = vst [vmem:[%s4 + $0xc8] sm:$0xff] %v256
  %287 = vst.msk [vmem:[%s4 + $0xd0] sm:$0xff] %vm195, %v257
  %288 = vst [vmem:[%s4 + $0xd8] sm:$0xf] %v258
  %289 = vst [vmem:[%s4 + $0xe0] sm:$0xf] %v259
  %290 = vst.msk [vmem:[%s4 + $0xe8] sm:$0xf] %vm199, %v260
  // Predicated region
  $region14: #{curves_forward.1} parent=0 // pred_check
    _
  $region15: #{curves_forward.1} parent=0 // pred_check_branch
    %292 = sbr.rel (0) target = $region17
  $region16: #{curves_forward.1} parent=0 // pred_region
    _
  $region17: #{curves_forward.1} parent=0 // pred_fallthru
    _
  // Predicated region
  $region18: #{curves_forward.1} parent=0 // pred_check
    _
  $region19: #{curves_forward.1} parent=0 // pred_check_branch
    %294 = sbr.rel (0) target = $region21
  $region20: #{curves_forward.1} parent=0 // pred_region
    _
  $region21: #{curves_forward.1} parent=0 // pred_fallthru
    _
  // Predicated region
  $region22: #{curves_forward.1} parent=0 // pred_check
    _
  $region23: #{curves_forward.1} parent=0 // pred_check_branch
    %296 = sbr.rel (0) target = $region25
  $region24: #{curves_forward.1} parent=0 // pred_region
    _
  $region25: #{curves_forward.1} parent=0 // pred_fallthru
    _
  // Predicated region
  $region26: #{curves_forward.1} parent=0 // pred_check
    _
  $region27: #{curves_forward.1} parent=0 // pred_check_branch
    %298 = sbr.rel (0) target = $region29
  $region28: #{curves_forward.1} parent=0 // pred_region
    _
  $region29: #{curves_forward.1} parent=0 // pred_fallthru
    _

</llo_original>
